<compile_context>
chip_gen: v7x
topology: tpu7x:2x2x1
jax: 0.10.0
libtpu: 0.0.40
codegen_flags: <defaults>
</compile_context>

<pallas_src>
import jax
import jax.numpy as jnp
from jax.experimental import pallas as pl
from jax.experimental.pallas import tpu as pltpu


def _round_up(x, m):
    return ((x + m - 1) // m) * m


def _vmem_budget_bytes():
    """Generation-aware VMEM limit (v5e/v6e: 128 MiB, v7x: 64 MiB per TC)."""
    try:
        cap = pltpu.get_tpu_info().vmem_capacity_bytes
    except Exception:
        cap = 64 * 1024 * 1024  # conservative (v7x-sized) fallback
    return int(cap) * 3 // 4


# ---------------- kernels ----------------

def _mlm_head_kernel_fullk(x_ref, w_ref, b_ref, o_ref):
    # x_ref: (tm, K), w_ref: (K, tn) -- non-transposed RHS, straight MXU feed.
    acc = jnp.dot(x_ref[...], w_ref[...], preferred_element_type=jnp.float32)
    o_ref[...] = (acc + b_ref[...].astype(jnp.float32)).astype(o_ref.dtype)


def _mlm_head_kernel_ktiled(x_ref, w_ref, b_ref, o_ref, acc_ref):
    k = pl.program_id(2)

    @pl.when(k == 0)
    def _():
        acc_ref[...] = jnp.zeros_like(acc_ref)

    # x_ref: (tm, tk), w_ref: (tk, tn)
    acc_ref[...] += jnp.dot(x_ref[...], w_ref[...],
                            preferred_element_type=jnp.float32)

    @pl.when(k == pl.num_programs(2) - 1)
    def _():
        o_ref[...] = (acc_ref[...] + b_ref[...].astype(jnp.float32)).astype(
            o_ref.dtype)


# ---------------- wrapper ----------------

def mlm_head(x, w, b, *, tm=1024, tn=512, tk=512, compute_dtype=None,
             full_k=None, vmem_limit_bytes=None):
    """Forward of PyTorch MLMHead: y = x @ w.T + b.

    x: (B, N, hidden); w: (vocab, hidden) [PyTorch nn.Linear layout]; b: (vocab,).
    Returns (B, N, vocab) in x.dtype.

    compute_dtype: optional (e.g. jnp.bfloat16) -- cast x/W before the matmul,
      accumulate in f32, add bias in f32, cast back to x.dtype.
    full_k: None = auto (prefer tk=K when it fits VMEM); True/False to force.
    """
    B, N, K = x.shape
    V, K2 = w.shape
    assert K == K2 and b.shape == (V,)

    out_dtype = x.dtype
    if compute_dtype is not None:
        x = x.astype(compute_dtype)
        w = w.astype(compute_dtype)
    in_dtype = x.dtype

    if vmem_limit_bytes is None:
        vmem_limit_bytes = _vmem_budget_bytes()
    budget = int(vmem_limit_bytes * 0.85)  # headroom for compiler scratch

    M = B * N
    K_pad = _round_up(K, 128)
    tm = max(8, min(tm, _round_up(M, 8)))
    tn = max(128, min(tn, _round_up(V, 128)))

    in_sz = jnp.dtype(in_dtype).itemsize
    out_sz = jnp.dtype(out_dtype).itemsize

    def fullk_footprint(tm_, tn_):
        # double-buffered x / W / bias tiles + double-buffered out tile
        return (2 * (tm_ * K_pad + K_pad * tn_ + tn_) * in_sz
                + 2 * tm_ * tn_ * out_sz)

    def ktiled_footprint(tm_, tn_, tk_):
        return (2 * (tm_ * tk_ + tk_ * tn_ + tn_) * in_sz
                + 2 * tm_ * tn_ * out_sz
                + tm_ * tn_ * 4)  # f32 accumulator scratch

    if full_k is None:
        # Prefer tk = K; shrink tm then tn until the full-K tiles fit.
        full_k = True
        while fullk_footprint(tm, tn) > budget:
            if tm > 8:
                tm = max(8, _round_up(tm // 2, 8))
            elif tn > 128:
                tn = max(128, _round_up(tn // 2, 128))
            else:
                full_k = False
                break

    if full_k:
        tk = K_pad
    else:
        tk = max(128, min((tk // 128) * 128, K_pad))
        while ktiled_footprint(tm, tn, tk) > budget and tk > 128:
            tk = max(128, _round_up(tk // 2, 128))
        while ktiled_footprint(tm, tn, tk) > budget and (tm > 8 or tn > 128):
            if tm > 8:
                tm = max(8, _round_up(tm // 2, 8))
            else:
                tn = max(128, _round_up(tn // 2, 128))
        K_pad = _round_up(K_pad, tk)

    M_pad = _round_up(M, tm)
    V_pad = _round_up(V, tn)

    # One-time layout work outside the kernel (W is a static parameter in the
    # real model, so the transpose/pad pass over HBM is amortized).
    x2d = x.reshape(M, K)
    wT = w.T                      # (K, V): non-transposed RHS for the MXU
    b2d = b.reshape(1, V)
    if M_pad != M or K_pad != K:
        x2d = jnp.pad(x2d, ((0, M_pad - M), (0, K_pad - K)))
    if K_pad != K or V_pad != V:
        wT = jnp.pad(wT, ((0, K_pad - K), (0, V_pad - V)))
    if V_pad != V:
        b2d = jnp.pad(b2d, ((0, 0), (0, V_pad - V)))

    grid_m, grid_n = M_pad // tm, V_pad // tn

    if full_k:
        cost = pl.CostEstimate(
            flops=2 * M_pad * V_pad * K_pad,
            transcendentals=0,
            bytes_accessed=(M_pad * K_pad * in_sz            # x read once per row block
                            + grid_m * V_pad * K_pad * in_sz  # W re-read per row block
                            + V_pad * in_sz
                            + M_pad * V_pad * out_sz))
        out2d = pl.pallas_call(
            _mlm_head_kernel_fullk,
            out_shape=jax.ShapeDtypeStruct((M_pad, V_pad), out_dtype),
            grid_spec=pltpu.PrefetchScalarGridSpec(
                num_scalar_prefetch=0,
                grid=(grid_m, grid_n),
                in_specs=[
                    pl.BlockSpec((tm, K_pad), lambda i, j: (i, 0)),  # x (resident across j)
                    pl.BlockSpec((K_pad, tn), lambda i, j: (0, j)),  # W.T tile
                    pl.BlockSpec((1, tn), lambda i, j: (0, j)),      # bias tile
                ],
                out_specs=pl.BlockSpec((tm, tn), lambda i, j: (i, j)),
            ),
            compiler_params=pltpu.CompilerParams(
                dimension_semantics=("parallel", "parallel"),
                vmem_limit_bytes=vmem_limit_bytes,
            ),
            cost_estimate=cost,
        )(x2d, wT, b2d)
    else:
        grid_k = K_pad // tk
        cost = pl.CostEstimate(
            flops=2 * M_pad * V_pad * K_pad,
            transcendentals=0,
            bytes_accessed=(grid_n * M_pad * K_pad * in_sz
                            + grid_m * V_pad * K_pad * in_sz
                            + V_pad * in_sz
                            + M_pad * V_pad * out_sz))
        # TODO(synk): if a profile shows exposed DMA on the weight stream, add
        # pipeline_mode=pl.Buffered(3) to the W BlockSpec only.
        out2d = pl.pallas_call(
            _mlm_head_kernel_ktiled,
            out_shape=jax.ShapeDtypeStruct((M_pad, V_pad), out_dtype),
            grid_spec=pltpu.PrefetchScalarGridSpec(
                num_scalar_prefetch=0,
                grid=(grid_m, grid_n, grid_k),
                in_specs=[
                    pl.BlockSpec((tm, tk), lambda i, j, k: (i, k)),  # x tile
                    pl.BlockSpec((tk, tn), lambda i, j, k: (k, j)),  # W.T tile
                    pl.BlockSpec((1, tn), lambda i, j, k: (0, j)),   # bias tile
                ],
                out_specs=pl.BlockSpec((tm, tn), lambda i, j, k: (i, j)),
                scratch_shapes=[pltpu.VMEM((tm, tn), jnp.float32)],
            ),
            compiler_params=pltpu.CompilerParams(
                dimension_semantics=("parallel", "parallel", "arbitrary"),
                vmem_limit_bytes=vmem_limit_bytes,
            ),
            cost_estimate=cost,
        )(x2d, wT, b2d)

    return out2d[:M, :V].reshape(B, N, V)


def reference(x, w, b):
    return x @ w.T + b


if __name__ == "__main__":
    key = jax.random.PRNGKey(0)
    kx, kw, kb = jax.random.split(key, 3)

    # --- Case 1: aligned dims, tiny explicit tiles; force the k-tiled
    #     accumulator path so grid = (2, 3, 2) and the pl.when init/finalize
    #     path is exercised.
    B, N, hidden, vocab = 2, 8, 256, 384
    x = jax.random.normal(kx, (B, N, hidden), dtype=jnp.float32)
    w = jax.random.normal(kw, (vocab, hidden), dtype=jnp.float32) * 0.05
    b = jax.random.normal(kb, (vocab,), dtype=jnp.float32) * 0.05
    ref1 = reference(x, w, b)
    out1 = jax.block_until_ready(
        mlm_head(x, w, b, tm=8, tn=128, tk=128, full_k=False))
    assert out1.shape == (B, N, vocab)
    assert jnp.allclose(out1, ref1, atol=1e-3, rtol=1e-3), "k-tiled path mismatch"

    # --- Case 2: unaligned dims (real vocab/hidden are not multiples of 128,
    #     M not a multiple of the row tile) -> exercises padding + the
    #     preferred full-K path with default tiles.
    B2, N2, hidden2, vocab2 = 2, 7, 250, 387
    k2 = jax.random.split(key, 6)
    x2 = jax.random.normal(k2[3], (B2, N2, hidden2), dtype=jnp.float32)
    w2 = jax.random.normal(k2[4], (vocab2, hidden2), dtype=jnp.float32) * 0.05
    b2 = jax.random.normal(k2[5], (vocab2,), dtype=jnp.float32) * 0.05
    ref2 = reference(x2, w2, b2)
    out2 = jax.block_until_ready(mlm_head(x2, w2, b2))
    assert out2.shape == (B2, N2, vocab2)
    assert jnp.allclose(out2, ref2, atol=1e-3, rtol=1e-3), "full-K path mismatch"

    # --- Case 3: bf16 compute path (f32 accumulation + f32 bias add), checked
    #     against an f32 reference on bf16-rounded inputs.
    xb = x2.astype(jnp.bfloat16).astype(jnp.float32)
    wb = w2.astype(jnp.bfloat16).astype(jnp.float32)
    ref3 = xb @ wb.T + b2
    out3 = jax.block_until_ready(
        mlm_head(x2, w2, b2, compute_dtype=jnp.bfloat16))
    assert jnp.allclose(out3, ref3, atol=2e-2, rtol=2e-2), "bf16 path mismatch"

    print("KERNEL_OK")
</pallas_src>

<mosaic_0001>
module attributes {stable_mosaic.version = 11 : i64} {
  func.func @_mlm_head_kernel_ktiled(%arg0: i32, %arg1: i32, %arg2: i32, %arg3: memref<8x128xf32, #tpu.memory_space<vmem>>, %arg4: memref<128x128xf32, #tpu.memory_space<vmem>>, %arg5: memref<1x128xf32, #tpu.memory_space<vmem>>, %arg6: memref<8x128xf32, #tpu.memory_space<vmem>>, %arg7: memref<8x128xf32, #tpu.memory_space<vmem>>) attributes {dimension_semantics = [#tpu.dimension_semantics<parallel>, #tpu.dimension_semantics<parallel>, #tpu.dimension_semantics<arbitrary>], iteration_bounds = array<i64: 2, 3, 2>, scalar_prefetch = 0 : i64, scratch_operands = 1 : i64, tpu.core_type = #tpu.core_type<tc>, window_params = [{transform_indices = @transform_0, window_bounds = array<i64: 8, 128>}, {transform_indices = @transform_1, window_bounds = array<i64: 128, 128>}, {transform_indices = @transform_2, window_bounds = array<i64: 1, 128>}, {transform_indices = @transform_3, window_bounds = array<i64: 8, 128>}]} {
    %c0_i32 = arith.constant 0 : i32
    %0 = arith.cmpi eq, %arg2, %c0_i32 : i32
    %1 = arith.extui %0 : i1 to i32
    %c0_i32_0 = arith.constant 0 : i32
    %2 = arith.cmpi ne, %1, %c0_i32_0 : i32
    scf.if %2 {
      %cst_9 = arith.constant 0.000000e+00 : f32
      %12 = vector.broadcast %cst_9 : f32 to vector<8x128xf32>
      %c0_10 = arith.constant 0 : index
      %c0_11 = arith.constant 0 : index
      %13 = vector.load %arg7[%c0_10, %c0_11] : memref<8x128xf32, #tpu.memory_space<vmem>>, vector<8x128xf32>
      tpu.vector_store %arg7[%c0_10, %c0_11], %12 {strides = array<i32>} : memref<8x128xf32, #tpu.memory_space<vmem>>, vector<8x128xf32>,
    } else {
    }
    %c0 = arith.constant 0 : index
    %c0_1 = arith.constant 0 : index
    %3 = vector.load %arg7[%c0, %c0_1] : memref<8x128xf32, #tpu.memory_space<vmem>>, vector<8x128xf32>
    %c0_2 = arith.constant 0 : index
    %c0_3 = arith.constant 0 : index
    %4 = vector.load %arg3[%c0_2, %c0_3] : memref<8x128xf32, #tpu.memory_space<vmem>>, vector<8x128xf32>
    %c0_4 = arith.constant 0 : index
    %c0_5 = arith.constant 0 : index
    %5 = vector.load %arg4[%c0_4, %c0_5] : memref<128x128xf32, #tpu.memory_space<vmem>>, vector<128x128xf32>
    %cst = arith.constant dense<0.000000e+00> : vector<8x128xf32>
    %6 = tpu.matmul %4, %5, %cst {dimension_numbers = #tpu.dot_dimension_numbers<[1], [0], [0], [1], [0, 0, 1, 1], [], []>} : vector<8x128xf32>, vector<128x128xf32>, vector<8x128xf32> -> vector<8x128xf32>
    %7 = arith.addf %3, %6 : vector<8x128xf32>
    %c0_6 = arith.constant 0 : index
    %c0_7 = arith.constant 0 : index
    %8 = vector.load %arg7[%c0_6, %c0_7] : memref<8x128xf32, #tpu.memory_space<vmem>>, vector<8x128xf32>
    tpu.vector_store %arg7[%c0_6, %c0_7], %7 {strides = array<i32>} : memref<8x128xf32, #tpu.memory_space<vmem>>, vector<8x128xf32>,
    %c1_i32 = arith.constant 1 : i32
    %9 = arith.cmpi eq, %arg2, %c1_i32 : i32
    %10 = arith.extui %9 : i1 to i32
    %c0_i32_8 = arith.constant 0 : i32
    %11 = arith.cmpi ne, %10, %c0_i32_8 : i32
    scf.if %11 {
      %c0_9 = arith.constant 0 : index
      %c0_10 = arith.constant 0 : index
      %12 = vector.load %arg7[%c0_9, %c0_10] : memref<8x128xf32, #tpu.memory_space<vmem>>, vector<8x128xf32>
      %c0_11 = arith.constant 0 : index
      %c0_12 = arith.constant 0 : index
      %13 = vector.load %arg5[%c0_11, %c0_12] : memref<1x128xf32, #tpu.memory_space<vmem>>, vector<1x128xf32>
      %14 = vector.broadcast %13 : vector<1x128xf32> to vector<8x128xf32>
      %15 = arith.addf %12, %14 : vector<8x128xf32>
      %c0_13 = arith.constant 0 : index
      %c0_14 = arith.constant 0 : index
      %16 = vector.load %arg6[%c0_13, %c0_14] : memref<8x128xf32, #tpu.memory_space<vmem>>, vector<8x128xf32>
      tpu.vector_store %arg6[%c0_13, %c0_14], %15 {strides = array<i32>} : memref<8x128xf32, #tpu.memory_space<vmem>>, vector<8x128xf32>,
    } else {
    }
    return
  }
  func.func @transform_0(%arg0: i32, %arg1: i32, %arg2: i32) -> (i32, i32) {
    %c0_i32 = arith.constant 0 : i32
    return %arg0, %arg2 : i32, i32
  }
  func.func @transform_1(%arg0: i32, %arg1: i32, %arg2: i32) -> (i32, i32) {
    %c0_i32 = arith.constant 0 : i32
    return %arg2, %arg1 : i32, i32
  }
  func.func @transform_2(%arg0: i32, %arg1: i32, %arg2: i32) -> (i32, i32) {
    %c0_i32 = arith.constant 0 : i32
    %c0_i32_0 = arith.constant 0 : i32
    return %c0_i32, %arg1 : i32, i32
  }
  func.func @transform_3(%arg0: i32, %arg1: i32, %arg2: i32) -> (i32, i32) {
    %c0_i32 = arith.constant 0 : i32
    return %arg0, %arg1 : i32, i32
  }
}

</mosaic_0001>

<llo_original>
// kernel: tpu_custom_call.1
$region0: #{tpu_custom_call.1}
  #allocation0 [shape = 'u32[]', space=smem, size = 0x4, offset = 0x4, fixed_abs, tag = 'smem constant byte address 0x4 - core index']
  #allocation1 [shape = 'u32[144,128]{1,0:T(1,128)}', space=vmem, size = 0x12000, scoped, tag = 'internal scratch']
  #allocation2 [shape = 'f32[8,128]{1,0:T(8,128)}', space=vmem, size = 0x1000, scoped, tag = 'scratch operand']
  %s0 = inlined_call_operand.hbm [shape: f32[16,256], index: 0, kind: input, shape index: {}]
  %s1 = inlined_call_operand.hbm [shape: f32[256,384], index: 1, kind: input, shape index: {}]
  %s2 = inlined_call_operand.vmem [shape: f32[1,384], index: 2, kind: input, shape index: {}]
  %s3 = inlined_call_operand.hbm [shape: f32[16,384], index: 3, kind: output, shape index: {}]
  %s4 = sld [smem:[#allocation0]]
  $region61: #{tpu_custom_call.1} parent=0
    _
  %s6 = ssub.s32 1, %s4
  %s7 = scalar_select 0, %s6, %s4
  $region1: #{tpu_custom_call.1} parent=0
    #allocation3 [shape = 'u8[8192]{0}', space=vmem, size = 0x2000, scoped, tag = 'input window, operand 0']
    #allocation4 [shape = 's32[2]{0}', space=sflag, size = 0x8, scoped, tag = 'scoped memory for tpu_custom_call.1']
    #allocation5 [shape = 's32[2]{0}', space=sflag, size = 0x8, scoped, tag = 'scoped memory for tpu_custom_call.1']
    #allocation6 [shape = 'u8[131072]{0}', space=vmem, size = 0x20000, scoped, tag = 'input window, operand 1']
    #allocation7 [shape = 's32[2]{0}', space=sflag, size = 0x8, scoped, tag = 'scoped memory for tpu_custom_call.1']
    #allocation8 [shape = 'u8[8192]{0}', space=vmem, size = 0x2000, scoped, tag = 'output window, operand 0']
    %8 = vsyncpa [#allocation4], 0
    %s9 = scalar_lea.sflag [#allocation4], 1
    %10 = vsyncpa %s9, 0
    %11 = vsyncpa [#allocation7], 0
    %s12 = scalar_lea.sflag [#allocation7], 1
    %13 = vsyncpa %s12, 0
    %14 = vsyncpa [#allocation5], 0
    %s15 = scalar_lea.sflag [#allocation5], 1
    %16 = vsyncpa %s15, 0
    loop: start=0, step=1, limit=14
    $region2: #{tpu_custom_call.1} parent=1 // loop_pre_header
      _
    $region3: #{tpu_custom_call.1} parent=1 // loop_header
      %s18 = sphi 0, %s22
      %p19 = scmp.ge.s32.totalorder %s18, 14
      %s25 = sphi 0, %s44
      %s26 = sphi 0, %s40
      %s27 = sphi 0, %s36
      %s28 = sphi 0, %s25
      %s29 = sphi 0, %s26
      %s30 = sphi 0, %s27
      %s31 = sphi 0, %s28
      %s32 = sphi 0, %s29
      %s33 = sphi 0, %s30
      %s49 = sphi 0, %s51
      %s52 = sphi 0, %s49
      %s53 = sphi 0, %s52
      %s69 = sphi 0, %s53
      %s77 = sphi 0, %s79
      %s80 = sphi 0, %s77
      %s81 = sphi 0, %s80
      %s97 = sphi 0, %s81
      %s103 = sphi 0, %s105
      %s106 = sphi 0, %s103
      %s107 = sphi 0, %s106
      %s123 = sphi 0, %s107
      %s131 = sphi 0, %s133
      %s134 = sphi 0, %s131
      %s135 = sphi 0, %s134
      %s151 = sphi 0, %s135
    $region4: #{tpu_custom_call.1} parent=1 // loop_header_branch
      %21 = sbr.rel (%p19) target = $region8
    $region5: #{tpu_custom_call.1} parent=1 // loop_body
      %s23 = ssub.s32 %s18, 1
      %s24 = ssub.s32 %s18, 2
      %s34 = sadd.s32 1, %s27
      %p35 = scmp.ge.s32.totalorder %s34, 2
      %s36 = scalar_select %p35, 0, %s34
      %s37 = sadd.s32 1, %s26
      %s38 = scalar_select %p35, %s37, %s26
      %p39 = scmp.ge.s32.totalorder %s38, 3
      %s40 = scalar_select %p39, 0, %s38
      %s41 = sadd.s32 1, %s25
      %s42 = scalar_select %p39, %s41, %s25
      %p43 = scmp.ge.s32.totalorder %s42, 2
      %s44 = scalar_select %p43, 0, %s42
      %s45 = ssub.s32 %s25, %s44
      %s46 = ssub.s32 %s27, %s36
      %s47 = sor.u32 %s45, %s46
      %p48 = scmp.eq.s32.totalorder %s47, 0
      %s50 = sadd.s32 %s49, 1
      %s51 = scalar_select %p48, %s49, %s50
      %p54 = pneg %p48
      %p55 = scmp.eq.s32.totalorder %s18, 11
      %p56 = por %p54, %p55
      %p57 = scmp.ne.s32.totalorder %s49, %s52
      %p58 = scmp.eq.s32.totalorder %s18, 0
      %p59 = por %p57, %p58
      %p60 = scmp.ne.s32.totalorder %s49, %s52
      %p61 = scmp.eq.s32.totalorder %s23, 11
      %p62 = por %p60, %p61
      %p63 = scmp.ne.s32.totalorder %s52, %s53
      %p64 = scmp.eq.s32.totalorder %s23, 0
      %p65 = por %p63, %p64
      %p66 = scmp.ne.s32.totalorder %s52, %s53
      %p67 = scmp.eq.s32.totalorder %s24, 11
      %p68 = por %p66, %p67
      %p70 = scmp.ne.s32.totalorder %s53, %s69
      %p71 = scmp.eq.s32.totalorder %s24, 0
      %p72 = por %p70, %p71
      %s73 = ssub.s32 %s27, %s36
      %s74 = ssub.s32 %s26, %s40
      %s75 = sor.u32 %s73, %s74
      %p76 = scmp.eq.s32.totalorder %s75, 0
      %s78 = sadd.s32 %s77, 1
      %s79 = scalar_select %p76, %s77, %s78
      %p82 = pneg %p76
      %p83 = scmp.eq.s32.totalorder %s18, 11
      %p84 = por %p82, %p83
      %p85 = scmp.ne.s32.totalorder %s77, %s80
      %p86 = scmp.eq.s32.totalorder %s18, 0
      %p87 = por %p85, %p86
      %p88 = scmp.ne.s32.totalorder %s77, %s80
      %p89 = scmp.eq.s32.totalorder %s23, 11
      %p90 = por %p88, %p89
      %p91 = scmp.ne.s32.totalorder %s80, %s81
      %p92 = scmp.eq.s32.totalorder %s23, 0
      %p93 = por %p91, %p92
      %p94 = scmp.ne.s32.totalorder %s80, %s81
      %p95 = scmp.eq.s32.totalorder %s24, 11
      %p96 = por %p94, %p95
      %p98 = scmp.ne.s32.totalorder %s81, %s97
      %p99 = scmp.eq.s32.totalorder %s24, 0
      %p100 = por %p98, %p99
      %s101 = ssub.s32 %s26, %s40
      %p102 = scmp.eq.s32.totalorder %s101, 0
      %s104 = sadd.s32 %s103, 1
      %s105 = scalar_select %p102, %s103, %s104
      %p108 = pneg %p102
      %p109 = scmp.eq.s32.totalorder %s18, 11
      %p110 = por %p108, %p109
      %p111 = scmp.ne.s32.totalorder %s103, %s106
      %p112 = scmp.eq.s32.totalorder %s18, 0
      %p113 = por %p111, %p112
      %p114 = scmp.ne.s32.totalorder %s103, %s106
      %p115 = scmp.eq.s32.totalorder %s23, 11
      %p116 = por %p114, %p115
      %p117 = scmp.ne.s32.totalorder %s106, %s107
      %p118 = scmp.eq.s32.totalorder %s23, 0
      %p119 = por %p117, %p118
      %p120 = scmp.ne.s32.totalorder %s106, %s107
      %p121 = scmp.eq.s32.totalorder %s24, 11
      %p122 = por %p120, %p121
      %p124 = scmp.ne.s32.totalorder %s107, %s123
      %p125 = scmp.eq.s32.totalorder %s24, 0
      %p126 = por %p124, %p125
      %s127 = ssub.s32 %s25, %s44
      %s128 = ssub.s32 %s26, %s40
      %s129 = sor.u32 %s127, %s128
      %p130 = scmp.eq.s32.totalorder %s129, 0
      %s132 = sadd.s32 %s131, 1
      %s133 = scalar_select %p130, %s131, %s132
      %p136 = pneg %p130
      %p137 = scmp.eq.s32.totalorder %s18, 11
      %p138 = por %p136, %p137
      %p139 = scmp.ne.s32.totalorder %s131, %s134
      %p140 = scmp.eq.s32.totalorder %s18, 0
      %p141 = por %p139, %p140
      %p142 = scmp.ne.s32.totalorder %s131, %s134
      %p143 = scmp.eq.s32.totalorder %s23, 11
      %p144 = por %p142, %p143
      %p145 = scmp.ne.s32.totalorder %s134, %s135
      %p146 = scmp.eq.s32.totalorder %s23, 0
      %p147 = por %p145, %p146
      %p148 = scmp.ne.s32.totalorder %s134, %s135
      %p149 = scmp.eq.s32.totalorder %s24, 11
      %p150 = por %p148, %p149
      %p152 = scmp.ne.s32.totalorder %s135, %s151
      %p153 = scmp.eq.s32.totalorder %s24, 0
      %p154 = por %p152, %p153
      %p155 = scmp.le.s32.totalorder 1, %s18
      %p156 = scmp.lt.s32.totalorder %s18, 13
      %p157 = pnand %p155, %p156
      %p158 = pneg %p157
      // Predicated region
      $region9: #{tpu_custom_call.1} parent=5 // pred_check
        _
      $region10: #{tpu_custom_call.1} parent=5 // pred_check_branch
        %160 = sbr.rel (%p157) target = $region12
      $region11: #{tpu_custom_call.1} parent=5 // pred_region
        %s161 = ssub.s32 %s18, 1
      $region12: #{tpu_custom_call.1} parent=5 // pred_fallthru
        _
      %p162 = scmp.lt.s32.totalorder %s18, 12
      // Predicated region
      $region13: #{tpu_custom_call.1} parent=5 // pred_check
        %p163 = pneg %p162
      $region14: #{tpu_custom_call.1} parent=5 // pred_check_branch
        %165 = sbr.rel (%p163) target = $region16
      $region15: #{tpu_custom_call.1} parent=5 // pred_region
        // Predicated region
        $region17: #{tpu_custom_call.1} parent=15 // pred_check
          %p166 = pneg %p59
        $region18: #{tpu_custom_call.1} parent=15 // pred_check_branch
          %168 = sbr.rel (%p166) target = $region20
        $region19: #{tpu_custom_call.1} parent=15 // pred_region
          %s169 = sand.u32 %s49, 1
          %s170 = scalar_lea.sflag [#allocation4], %s169
          %s171 = sand.u32 %s49, 1
          %s172 = smul.addr %s171, 8
          %s173 = scalar_lea.vmem [#allocation3], %s172
          %s175 = ssub.s32 128, 128
          %176 = vsyncadd %s170, %s175
          %s177 = smul.addr %s25, 2
          %s178 = sadd.s32 %s27, %s177
          %s179 = smul.addr %s178, 128
          %s180 = scalar_lea.hbm %s0, %s179
          %s182 = sshll.u32 %s173, 4
          %s183 = int_to_ptr.vmem [resolvable:$true] %s182
          %185 = dma.hbm_to_vmem [thread:$0]  %s180, 128, %s183, %s170
        $region20: #{tpu_custom_call.1} parent=15 // pred_fallthru
          _
        // Predicated region
        $region21: #{tpu_custom_call.1} parent=15 // pred_check
          %p186 = pneg %p87
        $region22: #{tpu_custom_call.1} parent=15 // pred_check_branch
          %188 = sbr.rel (%p186) target = $region24
        $region23: #{tpu_custom_call.1} parent=15 // pred_region
          %s189 = sand.u32 %s77, 1
          %s190 = scalar_lea.sflag [#allocation7], %s189
          %s191 = sand.u32 %s77, 1
          %s192 = smul.addr %s191, 128
          %s193 = scalar_lea.vmem [#allocation6], %s192
          %s194 = smul.u32 16, %s27
          %s196 = ssub.s32 2048, 2048
          %197 = vsyncadd %s190, %s196
          %s198 = smul.addr %s194, 3
          %s199 = sadd.s32 %s26, %s198
          %s200 = smul.addr %s199, 128
          %s201 = scalar_lea.hbm %s1, %s200
          %s202 = sshll.u32 %s193, 4
          %s203 = int_to_ptr.vmem [resolvable:$true] %s202
          %208 = dma.hbm_to_vmem [thread:$0]  %s201, 2048, %s203, %s190, 384, 128, 8
        $region24: #{tpu_custom_call.1} parent=15 // pred_fallthru
          _
        // Predicated region
        $region25: #{tpu_custom_call.1} parent=15 // pred_check
          %p209 = pneg %p113
        $region26: #{tpu_custom_call.1} parent=15 // pred_check_branch
          %211 = sbr.rel (%p209) target = $region28
        $region27: #{tpu_custom_call.1} parent=15 // pred_region
          %p212 = scmp.lt.s32.totalorder %s26, 2
          %s213 = scalar_select %p212, %s26, 2
          %s214 = scalar_lea.vmem %s2, %s213
        $region28: #{tpu_custom_call.1} parent=15 // pred_fallthru
          _
      $region16: #{tpu_custom_call.1} parent=5 // pred_fallthru
        _
      %p215 = scmp.le.s32.totalorder 1, %s18
      %p216 = scmp.lt.s32.totalorder %s18, 13
      %p217 = pnand %p215, %p216
      %p218 = pneg %p217
      // Predicated region
      $region29: #{tpu_custom_call.1} parent=5 // pred_check
        _
      $region30: #{tpu_custom_call.1} parent=5 // pred_check_branch
        %220 = sbr.rel (%p217) target = $region32
      $region31: #{tpu_custom_call.1} parent=5 // pred_region
        %s221 = ssub.s32 %s18, 1
        %s222 = sand.u32 %s52, 1
        %s223 = scalar_lea.sflag [#allocation4], %s222
        %s224 = sand.u32 %s52, 1
        %s225 = smul.addr %s224, 8
        %s226 = scalar_lea.vmem [#allocation3], %s225
        // Predicated region
        $region33: #{tpu_custom_call.1} parent=31 // pred_check
          %p227 = pneg %p65
        $region34: #{tpu_custom_call.1} parent=31 // pred_check_branch
          %229 = sbr.rel (%p227) target = $region36
        $region35: #{tpu_custom_call.1} parent=31 // pred_region
          %230 = dma.done %s223, 128
        $region36: #{tpu_custom_call.1} parent=31 // pred_fallthru
          _
        %s231 = sand.u32 %s80, 1
        %s232 = scalar_lea.sflag [#allocation7], %s231
        %s233 = sand.u32 %s80, 1
        %s234 = smul.addr %s233, 128
        %s235 = scalar_lea.vmem [#allocation6], %s234
        // Predicated region
        $region37: #{tpu_custom_call.1} parent=31 // pred_check
          %p236 = pneg %p93
        $region38: #{tpu_custom_call.1} parent=31 // pred_check_branch
          %238 = sbr.rel (%p236) target = $region40
        $region39: #{tpu_custom_call.1} parent=31 // pred_region
          %239 = dma.done %s232, 2048
        $region40: #{tpu_custom_call.1} parent=31 // pred_fallthru
          _
        %s240 = sand.u32 %s52, 1
        %s241 = scalar_lea.sflag [#allocation4], %s240
        %s242 = sand.u32 %s52, 1
        %s243 = smul.addr %s242, 8
        %s244 = scalar_lea.vmem [#allocation3], %s243
        %p245 = pneg %p65
        %p246 = pneg %p62
        %s247 = sand.u32 %s80, 1
        %s248 = scalar_lea.sflag [#allocation7], %s247
        %s249 = sand.u32 %s80, 1
        %s250 = smul.addr %s249, 128
        %s251 = scalar_lea.vmem [#allocation6], %s250
        %p252 = pneg %p93
        %p253 = pneg %p90
        %p254 = scmp.lt.s32.totalorder %s29, 2
        %s255 = scalar_select %p254, %s29, 2
        %s256 = scalar_lea.vmem %s2, %s255
        %p257 = pneg %p119
        %p258 = pneg %p116
        %p259 = pneg %p147
        %p260 = pneg %p144
        %s261 = sand.u32 %s134, 1
        %s262 = scalar_lea.sflag [#allocation5], %s261
        %s263 = sand.u32 %s134, 1
        %s264 = smul.addr %s263, 8
        %s265 = scalar_lea.vmem [#allocation8], %s264
        %s266 = smul.u32 16, %s30
        %p267 = scmp.lt.s32.totalorder %s29, 2
        %s268 = scalar_select %p267, %s29, 2
        %s269 = scalar_lea.vmem %s2, %s268
        %p270 = scmp.eq.s32.totalorder %s30, 0
        // Predicated region
        $region41: #{tpu_custom_call.1} parent=31 // pred_check
          %p271 = pneg %p270
        $region42: #{tpu_custom_call.1} parent=31 // pred_check_branch
          %273 = sbr.rel (%p271) target = $region44
        $region43: #{tpu_custom_call.1} parent=31 // pred_region
          %274 = vst [vmem:[#allocation2] sm:$0xff] 0.0
        $region44: #{tpu_custom_call.1} parent=31 // pred_fallthru
          _
        %v275 = vld [vmem:[#allocation2] sm:$0xff]
        %v276 = vld [vmem:[%s226] sm:$0xff]
        %v277 = vld [vmem:[%s235] sm:$0xff]
        %v278 = vld [vmem:[%s235 + $0x8] sm:$0xff]
        %v279 = vld [vmem:[%s235 + $0x10] sm:$0xff]
        %v280 = vld [vmem:[%s235 + $0x18] sm:$0xff]
        %v281 = vld [vmem:[%s235 + $0x20] sm:$0xff]
        %v282 = vld [vmem:[%s235 + $0x28] sm:$0xff]
        %v283 = vld [vmem:[%s235 + $0x30] sm:$0xff]
        %v284 = vld [vmem:[%s235 + $0x38] sm:$0xff]
        %v285 = vld [vmem:[%s235 + $0x40] sm:$0xff]
        %v286 = vld [vmem:[%s235 + $0x48] sm:$0xff]
        %v287 = vld [vmem:[%s235 + $0x50] sm:$0xff]
        %v288 = vld [vmem:[%s235 + $0x58] sm:$0xff]
        %v289 = vld [vmem:[%s235 + $0x60] sm:$0xff]
        %v290 = vld [vmem:[%s235 + $0x68] sm:$0xff]
        %v291 = vld [vmem:[%s235 + $0x70] sm:$0xff]
        %v292 = vld [vmem:[%s235 + $0x78] sm:$0xff]
        %293 = vmatprep.subr.mxu0 0.0
        %294 = vmatpush1.msra.mxu0 %v277
        %295 = vmatprep.subr.mxu0 0.0
        %296 = vmatpush1.msra.mxu0 %v278
        %297 = vmatprep.subr.mxu0 0.0
        %298 = vmatpush1.msra.mxu0 %v279
        %299 = vmatprep.subr.mxu0 0.0
        %300 = vmatpush1.msra.mxu0 %v280
        %301 = vmatprep.subr.mxu0 0.0
        %302 = vmatpush1.msra.mxu0 %v281
        %303 = vmatprep.subr.mxu0 0.0
        %304 = vmatpush1.msra.mxu0 %v282
        %305 = vmatprep.subr.mxu0 0.0
        %306 = vmatpush1.msra.mxu0 %v283
        %307 = vmatprep.subr.mxu0 0.0
        %308 = vmatpush1.msra.mxu0 %v284
        %309 = vmatprep.subr.mxu0 0.0
        %310 = vmatpush1.msra.mxu0 %v285
        %311 = vmatprep.subr.mxu0 0.0
        %312 = vmatpush1.msra.mxu0 %v286
        %313 = vmatprep.subr.mxu0 0.0
        %314 = vmatpush1.msra.mxu0 %v287
        %315 = vmatprep.subr.mxu0 0.0
        %316 = vmatpush1.msra.mxu0 %v288
        %317 = vmatprep.subr.mxu0 0.0
        %318 = vmatpush1.msra.mxu0 %v289
        %319 = vmatprep.subr.mxu0 0.0
        %320 = vmatpush1.msra.mxu0 %v290
        %321 = vmatprep.subr.mxu0 0.0
        %322 = vmatpush1.msra.mxu0 %v291
        %323 = vmatprep.subr.mxu0 0.0
        %324 = vmatpush1.msra.mxu0 %v292
        %325 = vmatprep.subr.mxu0 0.0
        %326 = vmatpush1.msra.mxu0 0.0
        %327 = vmatprep.subr.mxu0 0.0
        %328 = vmatpush1.msra.mxu0 0.0
        %329 = vmatprep.subr.mxu0 0.0
        %330 = vmatpush1.msra.mxu0 0.0
        %331 = vmatprep.subr.mxu0 0.0
        %332 = vmatpush1.msra.mxu0 0.0
        %333 = vmatprep.subr.mxu0 0.0
        %334 = vmatpush1.msra.mxu0 0.0
        %335 = vmatprep.subr.mxu0 0.0
        %336 = vmatpush1.msra.mxu0 0.0
        %337 = vmatprep.subr.mxu0 0.0
        %338 = vmatpush1.msra.mxu0 0.0
        %339 = vmatprep.subr.mxu0 0.0
        %340 = vmatpush1.msra.mxu0 0.0
        %341 = vmatprep.subr.mxu0 0.0
        %342 = vmatpush1.msra.mxu0 0.0
        %343 = vmatprep.subr.mxu0 0.0
        %344 = vmatpush1.msra.mxu0 0.0
        %345 = vmatprep.subr.mxu0 0.0
        %346 = vmatpush1.msra.mxu0 0.0
        %347 = vmatprep.subr.mxu0 0.0
        %348 = vmatpush1.msra.mxu0 0.0
        %349 = vmatprep.subr.mxu0 0.0
        %350 = vmatpush1.msra.mxu0 0.0
        %351 = vmatprep.subr.mxu0 0.0
        %352 = vmatpush1.msra.mxu0 0.0
        %353 = vmatprep.subr.mxu0 0.0
        %354 = vmatpush1.msra.mxu0 0.0
        %355 = vmatprep.subr.mxu0 0.0
        %356 = vmatpush1.msra.mxu0 0.0
        %357 = vmatprep.mubr.f32.mxu0 0.0
        %358 = vmatmul.mubr.f32.gmra.mrb[0].mxu0 %v276
        %v359 = vpop.f32.mrb[0].mxu0
        %v360 = vadd.f32 0.0, %v359
        %v361 = vpop.f32.mrb[0].mxu0
        %362 = vdwg.mxu0
        %v363 = vadd.f32 %v275, %v360
        %364 = vst [vmem:[#allocation2] sm:$0xff] %v363
        %p365 = scmp.eq.s32.totalorder %s30, 1
        // Predicated region
        $region45: #{tpu_custom_call.1} parent=31 // pred_check
          %p366 = pneg %p365
        $region46: #{tpu_custom_call.1} parent=31 // pred_check_branch
          %368 = sbr.rel (%p366) target = $region48
        $region47: #{tpu_custom_call.1} parent=31 // pred_region
          %v369 = vld [vmem:[#allocation2] sm:$0xff]
          %v370 = vld [vmem:[%s269] sm:$0x1]
          %v372 = vlaneseq
          %v373 = vshrl.u32 %v372, 7
          %v374 = vsub.s32 0, %v373
          %v375 = vrot.slane %v370, %v374
          %v377 = vadd.f32 %v369, %v375
          %378 = vst [vmem:[%s265] sm:$0xff] %v377
        $region48: #{tpu_custom_call.1} parent=31 // pred_fallthru
          _
        %s379 = sand.u32 %s134, 1
        %s380 = scalar_lea.sflag [#allocation5], %s379
        %s381 = sand.u32 %s134, 1
        %s382 = smul.addr %s381, 8
        %s383 = scalar_lea.vmem [#allocation8], %s382
        // Predicated region
        $region49: #{tpu_custom_call.1} parent=31 // pred_check
          %p384 = pneg %p144
        $region50: #{tpu_custom_call.1} parent=31 // pred_check_branch
          %386 = sbr.rel (%p384) target = $region52
        $region51: #{tpu_custom_call.1} parent=31 // pred_region
          %s388 = ssub.s32 128, 128
          %389 = vsyncadd %s380, %s388
          %s390 = smul.addr %s28, 3
          %s391 = sadd.s32 %s29, %s390
          %s392 = smul.addr %s391, 128
          %s393 = scalar_lea.hbm %s3, %s392
          %s395 = sshll.u32 %s383, 4
          %s396 = int_to_ptr.vmem [resolvable:$true] %s395
          %398 = dma.vmem_to_hbm [thread:$0]  %s396, 128, %s393, %s380
        $region52: #{tpu_custom_call.1} parent=31 // pred_fallthru
          _
      $region32: #{tpu_custom_call.1} parent=5 // pred_fallthru
        _
      %p399 = scmp.le.s32.totalorder 2, %s18
      // Predicated region
      $region53: #{tpu_custom_call.1} parent=5 // pred_check
        %p400 = pneg %p399
      $region54: #{tpu_custom_call.1} parent=5 // pred_check_branch
        %402 = sbr.rel (%p400) target = $region56
      $region55: #{tpu_custom_call.1} parent=5 // pred_region
        %s403 = ssub.s32 %s18, 2
        // Predicated region
        $region57: #{tpu_custom_call.1} parent=55 // pred_check
          %p404 = pneg %p150
        $region58: #{tpu_custom_call.1} parent=55 // pred_check_branch
          %406 = sbr.rel (%p404) target = $region60
        $region59: #{tpu_custom_call.1} parent=55 // pred_region
          %s407 = sand.u32 %s135, 1
          %s408 = scalar_lea.sflag [#allocation5], %s407
          %s409 = sand.u32 %s135, 1
          %s410 = smul.addr %s409, 8
          %s411 = scalar_lea.vmem [#allocation8], %s410
          %412 = dma.done %s408, 128
        $region60: #{tpu_custom_call.1} parent=55 // pred_fallthru
          _
      $region56: #{tpu_custom_call.1} parent=5 // pred_fallthru
        _
    $region6: #{tpu_custom_call.1} parent=1 // loop_footer
      %s22 = sadd.s32 1, %s18
    $region7: #{tpu_custom_call.1} parent=1 // loop_footer_branch
      %17 = sbr.rel target = $region3
    $region8: #{tpu_custom_call.1} parent=1 // loop_exit
      _
    %413 = vsyncpa [#allocation4], 1
    %s414 = scalar_lea.sflag [#allocation4], 1
    %415 = vsyncpa %s414, 1
    %416 = vsyncpa [#allocation7], 1
    %s417 = scalar_lea.sflag [#allocation7], 1
    %418 = vsyncpa %s417, 1
    %419 = vsyncpa [#allocation5], 1
    %s420 = scalar_lea.sflag [#allocation5], 1
    %421 = vsyncpa %s420, 1

</llo_original>
